<compile_context>
chip_gen: v7x
topology: tpu7x:2x2x1
jax: 0.10.0
libtpu: 0.0.40
codegen_flags: <defaults>
</compile_context>

<pallas_src>
import numpy as np
import jax
import jax.numpy as jnp
from jax import lax
from jax.experimental import pallas as pl
from jax.experimental.pallas import tpu as pltpu

HIDDEN = 128          # hidden_dim
K = 3                 # len(k_neighbors_embeddings_names) = 3 ('linear','linear','linear')
MAX_NEIGHBORS = 4     # max_num_neighbors
CIRCLE = MAX_NEIGHBORS + K - 1   # circle_size = max_num_neighbors + (k-1)
N_NODES = 200         # demo graph size (padded to a tile multiple inside the wrapper)
TILE = 128            # node tile per grid step (128 for v5e; 256 also fine on v6e/v7x)


def _elu(v):
    # torch.nn.ELU with alpha=1.0
    return jnp.where(v > 0, v, jnp.exp(v) - 1.0)


# ------------------------- kernel 1: fused per-node linears -------------------------
def embed_kernel(x_ref, w_ref, b_ref, nb_ref, self_ref, par_ref):
    # x tile (T,H) f32, W_cat (H,5H) bf16 resident, b_cat (1,5H) f32 resident.
    H = HIDDEN
    xb = x_ref[...].astype(jnp.bfloat16)
    e = jnp.dot(xb, w_ref[...], preferred_element_type=jnp.float32) + b_ref[...]
    # Split into the layouts / dtypes pass 2 wants (no per-step restacking later).
    nb_ref[...] = e[:, :K * H].astype(jnp.bfloat16)            # (T, 3H) bf16
    self_ref[...] = e[:, K * H:(K + 1) * H]                    # (T, H)  f32
    par_ref[...] = e[:, (K + 1) * H:(K + 2) * H].astype(jnp.bfloat16)   # (T, H) bf16


# ------------- kernel 2: fused one-hot gather + W3 fold + aggregation ---------------
def gather_agg_kernel(ci_ref, par_ref, self_ref, e_nb_ref, e_par_ref,
                      w3_ref, b3_ref, out_ref):
    H = HIDDEN
    ci = ci_ref[...]                                   # (T, C) int32, padded with -1
    par = par_ref[...]                                 # (T, 1) int32 parallel_node_index
    T, C = ci.shape
    Np = e_par_ref.shape[0]                            # padded number of nodes
    M = C - (K - 1)                                    # max_num_neighbors

    # ---- ChiENNMessage: neighbor counts ----
    padding = jnp.sum((ci == -1).astype(jnp.int32), axis=1, keepdims=True)   # (T,1)
    num_nb = jnp.where(padding == C, 0, C - padding - (K - 1))               # (T,1)

    # ---- fused one-hot gather: K shifted windows as three MXU dots ----
    node_iota = lax.broadcasted_iota(jnp.int32, (T * M, Np), 1)   # built once (hoisted)
    acc = jnp.zeros((T * M, H), jnp.float32)
    for k in range(K):
        # Fold the per-window validity (num_nb > k) and the -1 padding into the index:
        # invalid entries become -1 and never match the iota -> zero one-hot row.
        win = jnp.where(num_nb > k, ci[:, k:k + M], -1).reshape(T * M, 1)
        oh_k = (win == node_iota).astype(jnp.bfloat16)            # exact 0/1 in bf16
        acc = acc + jnp.dot(oh_k, e_nb_ref[:, k * H:(k + 1) * H],
                            preferred_element_type=jnp.float32)
    msg = acc.reshape(T, M, H)

    # Position-validity mask applied after the gather dot (ELU(0)=0 -> identical result,
    # but mask work drops from O(K*T*M*N) to O(T*M*H)).
    pos_m = lax.broadcasted_iota(jnp.int32, (T, M), 1)
    valid = (pos_m < num_nb)[:, :, None]
    msg = jnp.where(valid, msg, 0.0)

    # ---- final message embedding folded through the masked sum (linearity of W3) ----
    # sum_m_valid [ ELU(msg_m) @ W3 + b3 ]  ==  (sum_m ELU(msg_m)) @ W3 + num_nb * b3
    s = jnp.sum(_elu(msg), axis=1)                                # (T, H)
    agg_msg = (jnp.dot(s.astype(jnp.bfloat16), w3_ref[...],
                       preferred_element_type=jnp.float32)
               + num_nb.astype(jnp.float32) * b3_ref[...])

    # ---- ChiENNAggregate: self + parallel messages ----
    self_msg = self_ref[...]                                      # (T, H) f32
    par_iota = lax.broadcasted_iota(jnp.int32, (T, Np), 1)
    ohp = (par == par_iota).astype(jnp.bfloat16)                  # (T, Np)
    par_msg = jnp.dot(ohp, e_par_ref[...], preferred_element_type=jnp.float32)

    out = _elu(agg_msg + self_msg + par_msg)    # post_aggregation_embedding = 'ELU'
    # NOTE: the reference's `all_masked_mask` guard is dead code (self/parallel masks
    # are always True -> sum(all_mask) >= 2), so it is intentionally omitted here.
    out_ref[...] = out                          # dropout(p=0) == identity


def _vmem_limit_bytes():
    # 32 MiB was the old hard cap; open it up based on the chip's real VMEM
    # (96 MiB on 128-MiB v5e/v6e parts, ~48 MiB on v7x's 64 MiB per TC).
    try:
        cap = int(pltpu.get_tpu_info().vmem_capacity_bytes)
    except Exception:
        cap = 64 * 1024 * 1024
    return int(min(96 * 1024 * 1024, max(32 * 1024 * 1024, cap * 3 // 4)))


def chienn_forward(x, circle_index, parallel_index, params, tile=TILE):
    N, H = x.shape
    assert H == HIDDEN
    C = circle_index.shape[1]

    # Pad the node dimension up to a tile multiple; padded rows have no neighbors and
    # are sliced off at the end.
    n_pad = (-(-N // tile)) * tile
    ci = circle_index.astype(jnp.int32)
    par = parallel_index.astype(jnp.int32)
    if n_pad != N:
        x = jnp.concatenate([x, jnp.zeros((n_pad - N, H), x.dtype)], axis=0)
        ci = jnp.concatenate([ci, jnp.full((n_pad - N, C), -1, jnp.int32)], axis=0)
        par = jnp.concatenate([par, jnp.zeros((n_pad - N,), jnp.int32)], axis=0)
    par2d = par.reshape(n_pad, 1)

    # Fuse the five per-node linear layers into one (H, 5H) weight, bf16 on the MXU side.
    w_cat = jnp.concatenate([params['wk'][0], params['wk'][1], params['wk'][2],
                             params['w1'], params['w2']], axis=1).astype(jnp.bfloat16)
    b_cat = jnp.concatenate([params['bk'][0], params['bk'][1], params['bk'][2],
                             params['b1'], params['b2']], axis=1)    # (1, 5H) f32

    vmem = pltpu.MemorySpace.VMEM
    cparams = pltpu.CompilerParams(
        # v7x has 2 TCs: keep n_pad // tile >= 2 so the "parallel" axis feeds both.
        dimension_semantics=("parallel",),
        vmem_limit_bytes=_vmem_limit_bytes())
    grid = (n_pad // tile,)

    # ---- pass 1: per-node embedding slabs  [E0|E1|E2] bf16, self f32, parallel bf16 ----
    e_nb, e_self, e_par = pl.pallas_call(
        embed_kernel,
        out_shape=(jax.ShapeDtypeStruct((n_pad, K * H), jnp.bfloat16),
                   jax.ShapeDtypeStruct((n_pad, H), jnp.float32),
                   jax.ShapeDtypeStruct((n_pad, H), jnp.bfloat16)),
        grid=grid,
        in_specs=[pl.BlockSpec((tile, H), lambda i: (i, 0)),
                  pl.BlockSpec(memory_space=vmem),      # W_cat: single-buffered resident
                  pl.BlockSpec(memory_space=vmem)],     # b_cat: single-buffered resident
        out_specs=(pl.BlockSpec((tile, K * H), lambda i: (i, 0)),
                   pl.BlockSpec((tile, H), lambda i: (i, 0)),
                   pl.BlockSpec((tile, H), lambda i: (i, 0))),
        compiler_params=cparams,
    )(x, w_cat, b_cat)

    # ---- pass 2: gather + message head + aggregation, tiled over output nodes ----
    out = pl.pallas_call(
        gather_agg_kernel,
        out_shape=jax.ShapeDtypeStruct((n_pad, H), jnp.float32),
        grid=grid,
        in_specs=[pl.BlockSpec((tile, C), lambda i: (i, 0)),   # circle_index tile
                  pl.BlockSpec((tile, 1), lambda i: (i, 0)),   # parallel index tile
                  pl.BlockSpec((tile, H), lambda i: (i, 0)),   # self slab tile (f32)
                  pl.BlockSpec(memory_space=vmem),             # e_nb  (n_pad,3H) bf16 resident
                  pl.BlockSpec(memory_space=vmem),             # e_par (n_pad, H) bf16 resident
                  pl.BlockSpec(memory_space=vmem),             # W3 bf16 resident
                  pl.BlockSpec(memory_space=vmem)],            # b3 f32 resident
        out_specs=pl.BlockSpec((tile, H), lambda i: (i, 0)),
        compiler_params=cparams,
    )(ci, par2d, e_self, e_nb, e_par, params['w3'].astype(jnp.bfloat16), params['b3'])
    return out[:N]


# ---------------- pure-JAX f32 reference (direct translation of the torch code) ------
def chienn_ref(x, circle_index, parallel_index, params):
    N, H = x.shape
    C = circle_index.shape[1]
    wrap = K - 1
    emb = [x @ params['wk'][i] + params['bk'][i, 0] for i in range(K)]
    emb = [jnp.concatenate([jnp.zeros((1, H), jnp.float32), e], axis=0) for e in emb]
    padding = jnp.sum(circle_index == -1, axis=-1)
    num_nb = C - padding - wrap
    num_nb = jnp.where(padding == C, 0, num_nb)
    flat = circle_index.reshape(-1) + 1
    padded = jnp.concatenate([flat, jnp.zeros((wrap,), flat.dtype)])
    L = N * C
    shifted = []
    for i in range(K):
        se = emb[i][padded[i:i + L]]
        m = jnp.repeat((num_nb <= i)[:, None], C, axis=1).reshape(-1, 1)
        shifted.append(jnp.where(m, 0.0, se))
    msg = sum(shifted).reshape(N, C, H)
    msg_mask = jnp.arange(1, C + 1)[None, :] <= num_nb[:, None]
    msg = msg[:, :-wrap, :]
    msg_mask = msg_mask[:, :-wrap]
    msg = jnp.where(msg_mask[:, :, None], msg, 0.0)
    msg = _elu(msg) @ params['w3'] + params['b3']
    self_msg = x @ params['w1'] + params['b1']
    par_msg = (x @ params['w2'] + params['b2'])[parallel_index]
    all_msg = jnp.concatenate([msg, self_msg[:, None], par_msg[:, None]], axis=1)
    all_mask = jnp.concatenate([msg_mask, jnp.ones((N, 2), bool)], axis=1)
    xo = jnp.sum(jnp.where(all_mask[:, :, None], all_msg, 0.0), axis=1)
    xo = _elu(xo)
    xo = jnp.where((jnp.sum(all_mask, -1) == 0)[:, None], 0.0, xo)
    return xo


def init_params(key, hidden, k):
    ks = jax.random.split(key, 8)
    s = 1.0 / np.sqrt(hidden)
    return {
        'wk': jax.random.normal(ks[0], (k, hidden, hidden), jnp.float32) * s,  # W_4 (k slices)
        'bk': jax.random.normal(ks[1], (k, 1, hidden), jnp.float32) * s,
        'w3': jax.random.normal(ks[2], (hidden, hidden), jnp.float32) * s,     # W_3 (ELU+linear)
        'b3': jax.random.normal(ks[3], (1, hidden), jnp.float32) * s,
        'w1': jax.random.normal(ks[4], (hidden, hidden), jnp.float32) * s,     # W_1 (self)
        'b1': jax.random.normal(ks[5], (1, hidden), jnp.float32) * s,
        'w2': jax.random.normal(ks[6], (hidden, hidden), jnp.float32) * s,     # W_2 (parallel)
        'b2': jax.random.normal(ks[7], (1, hidden), jnp.float32) * s,
    }


if __name__ == "__main__":
    key = jax.random.PRNGKey(0)
    k_param, k_x, k_par, k_deg, k_nb = jax.random.split(key, 5)

    params = init_params(k_param, HIDDEN, K)
    x = jax.random.normal(k_x, (N_NODES, HIDDEN), jnp.float32)
    parallel_index = jax.random.randint(k_par, (N_NODES,), 0, N_NODES, dtype=jnp.int32)

    # Build circle_index the way ChiENN expects: d neighbor ids, then the first (k-1)
    # ids repeated (wrapping), padded with -1 up to circle_size.
    degrees = np.asarray(jax.random.randint(k_deg, (N_NODES,), 0, MAX_NEIGHBORS + 1))
    nb_ids = np.asarray(jax.random.randint(k_nb, (N_NODES, MAX_NEIGHBORS), 0, N_NODES))
    circle_np = np.full((N_NODES, CIRCLE), -1, dtype=np.int32)
    for n in range(N_NODES):
        d = int(degrees[n])
        if d == 0:
            continue
        seq = [int(v) for v in nb_ids[n, :d]]
        seq = seq + [seq[j % d] for j in range(K - 1)]
        circle_np[n, :len(seq)] = seq
    circle_index = jnp.asarray(circle_np)

    out = chienn_forward(x, circle_index, parallel_index, params, tile=TILE)
    out = jax.block_until_ready(out)

    ref = jax.block_until_ready(chienn_ref(x, circle_index, parallel_index, params))
    # Tolerance widened vs the pure-f32 reference because the gather / linear MXU
    # inputs are bf16 (per performance guidance); observed error is well inside this.
    np.testing.assert_allclose(np.asarray(out), np.asarray(ref), rtol=5e-2, atol=5e-2)

    print("KERNEL_OK")
</pallas_src>

<mosaic_0001>
module attributes {stable_mosaic.version = 11 : i64} {
  func.func @embed_kernel(%arg0: i32, %arg1: memref<128x128xf32, #tpu.memory_space<vmem>>, %arg2: memref<128x640xbf16, #tpu.memory_space<vmem>>, %arg3: memref<1x640xf32, #tpu.memory_space<vmem>>, %arg4: memref<128x384xbf16, #tpu.memory_space<vmem>>, %arg5: memref<128x128xf32, #tpu.memory_space<vmem>>, %arg6: memref<128x128xbf16, #tpu.memory_space<vmem>>) attributes {dimension_semantics = [#tpu.dimension_semantics<parallel>], iteration_bounds = array<i64: 2>, scalar_prefetch = 0 : i64, scratch_operands = 0 : i64, tpu.core_type = #tpu.core_type<tc>, window_params = [{transform_indices = @transform_0, window_bounds = array<i64: 128, 128>}, {pipeline_mode = #tpu.pipeline_mode<synchronous>, transform_indices = @transform_1, window_bounds = array<i64: 128, 640>}, {pipeline_mode = #tpu.pipeline_mode<synchronous>, transform_indices = @transform_2, window_bounds = array<i64: 1, 640>}, {transform_indices = @transform_3, window_bounds = array<i64: 128, 384>}, {transform_indices = @transform_4, window_bounds = array<i64: 128, 128>}, {transform_indices = @transform_5, window_bounds = array<i64: 128, 128>}]} {
    %c0 = arith.constant 0 : index
    %c0_0 = arith.constant 0 : index
    %0 = vector.load %arg1[%c0, %c0_0] : memref<128x128xf32, #tpu.memory_space<vmem>>, vector<128x128xf32>
    %1 = arith.truncf %0 : vector<128x128xf32> to vector<128x128xbf16>
    %c0_1 = arith.constant 0 : index
    %c0_2 = arith.constant 0 : index
    %2 = vector.load %arg2[%c0_1, %c0_2] : memref<128x640xbf16, #tpu.memory_space<vmem>>, vector<128x640xbf16>
    %cst = arith.constant dense<0.000000e+00> : vector<128x640xf32>
    %3 = tpu.matmul %1, %2, %cst {dimension_numbers = #tpu.dot_dimension_numbers<[1], [0], [0], [1], [0, 0, 1, 1], [], []>} : vector<128x128xbf16>, vector<128x640xbf16>, vector<128x640xf32> -> vector<128x640xf32>
    %c0_3 = arith.constant 0 : index
    %c0_4 = arith.constant 0 : index
    %4 = vector.load %arg3[%c0_3, %c0_4] : memref<1x640xf32, #tpu.memory_space<vmem>>, vector<1x640xf32>
    %5 = vector.broadcast %4 : vector<1x640xf32> to vector<128x640xf32>
    %6 = arith.addf %3, %5 : vector<128x640xf32>
    %7 = vector.extract_strided_slice %6 {offsets = [0, 0], sizes = [128, 384], strides = [1, 1]} : vector<128x640xf32> to vector<128x384xf32>
    %8 = arith.truncf %7 : vector<128x384xf32> to vector<128x384xbf16>
    %c0_5 = arith.constant 0 : index
    %c0_6 = arith.constant 0 : index
    %9 = vector.load %arg4[%c0_5, %c0_6] : memref<128x384xbf16, #tpu.memory_space<vmem>>, vector<128x384xbf16>
    tpu.vector_store %arg4[%c0_5, %c0_6], %8 {strides = array<i32>} : memref<128x384xbf16, #tpu.memory_space<vmem>>, vector<128x384xbf16>,
    %10 = vector.extract_strided_slice %6 {offsets = [0, 384], sizes = [128, 128], strides = [1, 1]} : vector<128x640xf32> to vector<128x128xf32>
    %c0_7 = arith.constant 0 : index
    %c0_8 = arith.constant 0 : index
    %11 = vector.load %arg5[%c0_7, %c0_8] : memref<128x128xf32, #tpu.memory_space<vmem>>, vector<128x128xf32>
    tpu.vector_store %arg5[%c0_7, %c0_8], %10 {strides = array<i32>} : memref<128x128xf32, #tpu.memory_space<vmem>>, vector<128x128xf32>,
    %12 = vector.extract_strided_slice %6 {offsets = [0, 512], sizes = [128, 128], strides = [1, 1]} : vector<128x640xf32> to vector<128x128xf32>
    %13 = arith.truncf %12 : vector<128x128xf32> to vector<128x128xbf16>
    %c0_9 = arith.constant 0 : index
    %c0_10 = arith.constant 0 : index
    %14 = vector.load %arg6[%c0_9, %c0_10] : memref<128x128xbf16, #tpu.memory_space<vmem>>, vector<128x128xbf16>
    tpu.vector_store %arg6[%c0_9, %c0_10], %13 {strides = array<i32>} : memref<128x128xbf16, #tpu.memory_space<vmem>>, vector<128x128xbf16>,
    return
  }
  func.func @transform_0(%arg0: i32) -> (i32, i32) {
    %c0_i32 = arith.constant 0 : i32
    %c0_i32_0 = arith.constant 0 : i32
    return %arg0, %c0_i32 : i32, i32
  }
  func.func @transform_1(%arg0: i32) -> (i32, i32) {
    %c0_i32 = arith.constant 0 : i32
    %c0_i32_0 = arith.constant 0 : i32
    %c0_i32_1 = arith.constant 0 : i32
    return %c0_i32, %c0_i32_0 : i32, i32
  }
  func.func @transform_2(%arg0: i32) -> (i32, i32) {
    %c0_i32 = arith.constant 0 : i32
    %c0_i32_0 = arith.constant 0 : i32
    %c0_i32_1 = arith.constant 0 : i32
    return %c0_i32, %c0_i32_0 : i32, i32
  }
  func.func @transform_3(%arg0: i32) -> (i32, i32) {
    %c0_i32 = arith.constant 0 : i32
    %c0_i32_0 = arith.constant 0 : i32
    return %arg0, %c0_i32 : i32, i32
  }
  func.func @transform_4(%arg0: i32) -> (i32, i32) {
    %c0_i32 = arith.constant 0 : i32
    %c0_i32_0 = arith.constant 0 : i32
    return %arg0, %c0_i32 : i32, i32
  }
  func.func @transform_5(%arg0: i32) -> (i32, i32) {
    %c0_i32 = arith.constant 0 : i32
    %c0_i32_0 = arith.constant 0 : i32
    return %arg0, %c0_i32 : i32, i32
  }
}

</mosaic_0001>

<llo_original>
// kernel: tpu_custom_call.1
$region0: #{tpu_custom_call.1}
  #allocation0 [shape = 'u32[]', space=smem, size = 0x4, offset = 0x4, fixed_abs, tag = 'smem constant byte address 0x4 - core index']
  #allocation1 [shape = 'u32[144,128]{1,0:T(1,128)}', space=vmem, size = 0x12000, scoped, tag = 'internal scratch']
  %s0 = inlined_call_operand.hbm [shape: f32[256,128], index: 0, kind: input, shape index: {}]
  %s1 = inlined_call_operand.hbm [shape: bf16[128,640], index: 1, kind: input, shape index: {}]
  %s2 = inlined_call_operand.vmem [shape: f32[1,640], index: 2, kind: input, shape index: {}]
  %s3 = inlined_call_operand.hbm [shape: bf16[256,384], index: 3, kind: output, shape index: {0}]
  %s4 = inlined_call_operand.hbm [shape: f32[256,128], index: 4, kind: output, shape index: {1}]
  %s5 = inlined_call_operand.hbm [shape: bf16[256,128], index: 5, kind: output, shape index: {2}]
  %6 = xla_tuple %s3, %s4, %s5
  %s7 = sld [smem:[#allocation0]]
  $region69: #{tpu_custom_call.1} parent=0
    _
  %s9 = ssub.s32 1, %s7
  %s10 = scalar_select 0, %s9, %s7
  $region1: #{tpu_custom_call.1} parent=0
    #allocation2 [shape = 'u8[131072]{0}', space=vmem, size = 0x20000, scoped, tag = 'input window, operand 0']
    #allocation3 [shape = 's32[2]{0}', space=sflag, size = 0x8, scoped, tag = 'scoped memory for tpu_custom_call.1']
    #allocation4 [shape = 's32[2]{0}', space=sflag, size = 0x8, scoped, tag = 'scoped memory for tpu_custom_call.1']
    #allocation5 [shape = 'u8[163840]{0}', space=vmem, size = 0x28000, scoped, tag = 'input window, operand 1, single buffered']
    #allocation6 [shape = 's32[1]{0}', space=sflag, size = 0x4, scoped, tag = 'scoped memory for tpu_custom_call.1']
    #allocation7 [shape = 'u8[196608]{0}', space=vmem, size = 0x30000, scoped, tag = 'output window, operand 0']
    #allocation8 [shape = 'u8[131072]{0}', space=vmem, size = 0x20000, scoped, tag = 'output window, operand 1']
    #allocation9 [shape = 's32[2]{0}', space=sflag, size = 0x8, scoped, tag = 'scoped memory for tpu_custom_call.1']
    #allocation10 [shape = 'u8[65536]{0}', space=vmem, size = 0x10000, scoped, tag = 'output window, operand 2']
    %11 = vsyncpa [#allocation3], 0
    %s12 = scalar_lea.sflag [#allocation3], 1
    %13 = vsyncpa %s12, 0
    %14 = vsyncpa [#allocation6], 0
    %15 = vsyncpa [#allocation4], 0
    %s16 = scalar_lea.sflag [#allocation4], 1
    %17 = vsyncpa %s16, 0
    %18 = vsyncpa [#allocation9], 0
    %s19 = scalar_lea.sflag [#allocation9], 1
    %20 = vsyncpa %s19, 0
    loop: start=0, step=1, limit=4
    $region2: #{tpu_custom_call.1} parent=1 // loop_pre_header
      _
    $region3: #{tpu_custom_call.1} parent=1 // loop_header
      %s22 = sphi 0, %s26
      %p23 = scmp.ge.s32.totalorder %s22, 4
      %s32 = sphi 0, %s34
      %s35 = sphi 0, %s32
      %s36 = sphi 0, %s35
      %s52 = sphi 0, %s36
      %s56 = sphi 0, %s56
      %s58 = sphi 0, %s56
      %s59 = sphi 0, %s58
      %s73 = sphi 0, %s59
      %s77 = sphi 0, %s77
      %s79 = sphi 0, %s77
      %s80 = sphi 0, %s79
      %s94 = sphi 0, %s80
      %s100 = sphi 0, %s102
      %s103 = sphi 0, %s100
      %s104 = sphi 0, %s103
      %s120 = sphi 0, %s104
      %s126 = sphi 0, %s128
      %s129 = sphi 0, %s126
      %s130 = sphi 0, %s129
      %s146 = sphi 0, %s130
      %s152 = sphi 0, %s154
      %s155 = sphi 0, %s152
      %s156 = sphi 0, %s155
      %s172 = sphi 0, %s156
    $region4: #{tpu_custom_call.1} parent=1 // loop_header_branch
      %25 = sbr.rel (%p23) target = $region8
    $region5: #{tpu_custom_call.1} parent=1 // loop_body
      %s27 = ssub.s32 %s22, 1
      %s28 = ssub.s32 %s22, 2
      %s29 = sadd.s32 %s22, 1
      %s30 = ssub.s32 %s22, %s29
      %p31 = scmp.eq.s32.totalorder %s30, 0
      %s33 = sadd.s32 %s32, 1
      %s34 = scalar_select %p31, %s32, %s33
      %p37 = pneg %p31
      %p38 = scmp.eq.s32.totalorder %s22, 1
      %p39 = por %p37, %p38
      %p40 = scmp.ne.s32.totalorder %s32, %s35
      %p41 = scmp.eq.s32.totalorder %s22, 0
      %p42 = por %p40, %p41
      %p43 = scmp.ne.s32.totalorder %s32, %s35
      %p44 = scmp.eq.s32.totalorder %s27, 1
      %p45 = por %p43, %p44
      %p46 = scmp.ne.s32.totalorder %s35, %s36
      %p47 = scmp.eq.s32.totalorder %s27, 0
      %p48 = por %p46, %p47
      %p49 = scmp.ne.s32.totalorder %s35, %s36
      %p50 = scmp.eq.s32.totalorder %s28, 1
      %p51 = por %p49, %p50
      %p53 = scmp.ne.s32.totalorder %s36, %s52
      %p54 = scmp.eq.s32.totalorder %s28, 0
      %p55 = por %p53, %p54
      %s57 = sadd.s32 %s56, 1
      %p60 = scmp.eq.s32.totalorder %s22, 1
      %p61 = scmp.ne.s32.totalorder %s56, %s58
      %p62 = scmp.eq.s32.totalorder %s22, 0
      %p63 = por %p61, %p62
      %p64 = scmp.ne.s32.totalorder %s56, %s58
      %p65 = scmp.eq.s32.totalorder %s27, 1
      %p66 = por %p64, %p65
      %p67 = scmp.ne.s32.totalorder %s58, %s59
      %p68 = scmp.eq.s32.totalorder %s27, 0
      %p69 = por %p67, %p68
      %p70 = scmp.ne.s32.totalorder %s58, %s59
      %p71 = scmp.eq.s32.totalorder %s28, 1
      %p72 = por %p70, %p71
      %p74 = scmp.ne.s32.totalorder %s59, %s73
      %p75 = scmp.eq.s32.totalorder %s28, 0
      %p76 = por %p74, %p75
      %s78 = sadd.s32 %s77, 1
      %p81 = scmp.eq.s32.totalorder %s22, 1
      %p82 = scmp.ne.s32.totalorder %s77, %s79
      %p83 = scmp.eq.s32.totalorder %s22, 0
      %p84 = por %p82, %p83
      %p85 = scmp.ne.s32.totalorder %s77, %s79
      %p86 = scmp.eq.s32.totalorder %s27, 1
      %p87 = por %p85, %p86
      %p88 = scmp.ne.s32.totalorder %s79, %s80
      %p89 = scmp.eq.s32.totalorder %s27, 0
      %p90 = por %p88, %p89
      %p91 = scmp.ne.s32.totalorder %s79, %s80
      %p92 = scmp.eq.s32.totalorder %s28, 1
      %p93 = por %p91, %p92
      %p95 = scmp.ne.s32.totalorder %s80, %s94
      %p96 = scmp.eq.s32.totalorder %s28, 0
      %p97 = por %p95, %p96
      %s98 = ssub.s32 %s22, %s29
      %p99 = scmp.eq.s32.totalorder %s98, 0
      %s101 = sadd.s32 %s100, 1
      %s102 = scalar_select %p99, %s100, %s101
      %p105 = pneg %p99
      %p106 = scmp.eq.s32.totalorder %s22, 1
      %p107 = por %p105, %p106
      %p108 = scmp.ne.s32.totalorder %s100, %s103
      %p109 = scmp.eq.s32.totalorder %s22, 0
      %p110 = por %p108, %p109
      %p111 = scmp.ne.s32.totalorder %s100, %s103
      %p112 = scmp.eq.s32.totalorder %s27, 1
      %p113 = por %p111, %p112
      %p114 = scmp.ne.s32.totalorder %s103, %s104
      %p115 = scmp.eq.s32.totalorder %s27, 0
      %p116 = por %p114, %p115
      %p117 = scmp.ne.s32.totalorder %s103, %s104
      %p118 = scmp.eq.s32.totalorder %s28, 1
      %p119 = por %p117, %p118
      %p121 = scmp.ne.s32.totalorder %s104, %s120
      %p122 = scmp.eq.s32.totalorder %s28, 0
      %p123 = por %p121, %p122
      %s124 = ssub.s32 %s22, %s29
      %p125 = scmp.eq.s32.totalorder %s124, 0
      %s127 = sadd.s32 %s126, 1
      %s128 = scalar_select %p125, %s126, %s127
      %p131 = pneg %p125
      %p132 = scmp.eq.s32.totalorder %s22, 1
      %p133 = por %p131, %p132
      %p134 = scmp.ne.s32.totalorder %s126, %s129
      %p135 = scmp.eq.s32.totalorder %s22, 0
      %p136 = por %p134, %p135
      %p137 = scmp.ne.s32.totalorder %s126, %s129
      %p138 = scmp.eq.s32.totalorder %s27, 1
      %p139 = por %p137, %p138
      %p140 = scmp.ne.s32.totalorder %s129, %s130
      %p141 = scmp.eq.s32.totalorder %s27, 0
      %p142 = por %p140, %p141
      %p143 = scmp.ne.s32.totalorder %s129, %s130
      %p144 = scmp.eq.s32.totalorder %s28, 1
      %p145 = por %p143, %p144
      %p147 = scmp.ne.s32.totalorder %s130, %s146
      %p148 = scmp.eq.s32.totalorder %s28, 0
      %p149 = por %p147, %p148
      %s150 = ssub.s32 %s22, %s29
      %p151 = scmp.eq.s32.totalorder %s150, 0
      %s153 = sadd.s32 %s152, 1
      %s154 = scalar_select %p151, %s152, %s153
      %p157 = pneg %p151
      %p158 = scmp.eq.s32.totalorder %s22, 1
      %p159 = por %p157, %p158
      %p160 = scmp.ne.s32.totalorder %s152, %s155
      %p161 = scmp.eq.s32.totalorder %s22, 0
      %p162 = por %p160, %p161
      %p163 = scmp.ne.s32.totalorder %s152, %s155
      %p164 = scmp.eq.s32.totalorder %s27, 1
      %p165 = por %p163, %p164
      %p166 = scmp.ne.s32.totalorder %s155, %s156
      %p167 = scmp.eq.s32.totalorder %s27, 0
      %p168 = por %p166, %p167
      %p169 = scmp.ne.s32.totalorder %s155, %s156
      %p170 = scmp.eq.s32.totalorder %s28, 1
      %p171 = por %p169, %p170
      %p173 = scmp.ne.s32.totalorder %s156, %s172
      %p174 = scmp.eq.s32.totalorder %s28, 0
      %p175 = por %p173, %p174
      %p176 = scmp.le.s32.totalorder 1, %s22
      %p177 = scmp.lt.s32.totalorder %s22, 3
      %p178 = pnand %p176, %p177
      %p179 = pneg %p178
      // Predicated region
      $region9: #{tpu_custom_call.1} parent=5 // pred_check
        _
      $region10: #{tpu_custom_call.1} parent=5 // pred_check_branch
        %181 = sbr.rel (%p178) target = $region12
      $region11: #{tpu_custom_call.1} parent=5 // pred_region
        %s182 = ssub.s32 %s22, 1
        // Predicated region
        $region13: #{tpu_custom_call.1} parent=11 // pred_check
          %p183 = pneg %p69
        $region14: #{tpu_custom_call.1} parent=11 // pred_check_branch
          %185 = sbr.rel (%p183) target = $region16
        $region15: #{tpu_custom_call.1} parent=11 // pred_region
          %s187 = ssub.s32 5120, 5120
          %188 = vsyncadd [#allocation6], %s187
          %s189 = sshll.u32 [#allocation5], 4
          %s190 = int_to_ptr.vmem [resolvable:$true] %s189
          %195 = dma.hbm_to_vmem [thread:$0]  %s1, 5120, %s190, [#allocation6], 320, 320, 20
        $region16: #{tpu_custom_call.1} parent=11 // pred_fallthru
          _
        // Predicated region
        $region17: #{tpu_custom_call.1} parent=11 // pred_check
          %p196 = pneg %p90
        $region18: #{tpu_custom_call.1} parent=11 // pred_check_branch
          %198 = sbr.rel (%p196) target = $region20
        $region19: #{tpu_custom_call.1} parent=11 // pred_region
          _
        $region20: #{tpu_custom_call.1} parent=11 // pred_fallthru
          _
      $region12: #{tpu_custom_call.1} parent=5 // pred_fallthru
        _
      %p199 = scmp.lt.s32.totalorder %s22, 2
      // Predicated region
      $region21: #{tpu_custom_call.1} parent=5 // pred_check
        %p200 = pneg %p199
      $region22: #{tpu_custom_call.1} parent=5 // pred_check_branch
        %202 = sbr.rel (%p200) target = $region24
      $region23: #{tpu_custom_call.1} parent=5 // pred_region
        // Predicated region
        $region25: #{tpu_custom_call.1} parent=23 // pred_check
          %p203 = pneg %p42
        $region26: #{tpu_custom_call.1} parent=23 // pred_check_branch
          %205 = sbr.rel (%p203) target = $region28
        $region27: #{tpu_custom_call.1} parent=23 // pred_region
          %s206 = sand.u32 %s32, 1
          %s207 = scalar_lea.sflag [#allocation3], %s206
          %s208 = sand.u32 %s32, 1
          %s209 = smul.addr %s208, 128
          %s210 = scalar_lea.vmem [#allocation2], %s209
          %s211 = smul.u32 16, %s22
          %s213 = ssub.s32 2048, 2048
          %214 = vsyncadd %s207, %s213
          %s215 = smul.addr %s211, 128
          %s216 = scalar_lea.hbm %s0, %s215
          %s217 = sshll.u32 %s210, 4
          %s218 = int_to_ptr.vmem [resolvable:$true] %s217
          %223 = dma.hbm_to_vmem [thread:$0]  %s216, 2048, %s218, %s207, 128, 128, 8
        $region28: #{tpu_custom_call.1} parent=23 // pred_fallthru
          _
      $region24: #{tpu_custom_call.1} parent=5 // pred_fallthru
        _
      %p224 = scmp.le.s32.totalorder 1, %s22
      %p225 = scmp.lt.s32.totalorder %s22, 3
      %p226 = pnand %p224, %p225
      %p227 = pneg %p226
      // Predicated region
      $region29: #{tpu_custom_call.1} parent=5 // pred_check
        _
      $region30: #{tpu_custom_call.1} parent=5 // pred_check_branch
        %229 = sbr.rel (%p226) target = $region32
      $region31: #{tpu_custom_call.1} parent=5 // pred_region
        %s230 = ssub.s32 %s22, 1
        %s231 = sand.u32 %s35, 1
        %s232 = scalar_lea.sflag [#allocation3], %s231
        %s233 = sand.u32 %s35, 1
        %s234 = smul.addr %s233, 128
        %s235 = scalar_lea.vmem [#allocation2], %s234
        // Predicated region
        $region33: #{tpu_custom_call.1} parent=31 // pred_check
          %p236 = pneg %p48
        $region34: #{tpu_custom_call.1} parent=31 // pred_check_branch
          %238 = sbr.rel (%p236) target = $region36
        $region35: #{tpu_custom_call.1} parent=31 // pred_region
          %239 = dma.done %s232, 2048
        $region36: #{tpu_custom_call.1} parent=31 // pred_fallthru
          _
        // Predicated region
        $region37: #{tpu_custom_call.1} parent=31 // pred_check
          %p240 = pneg %p69
        $region38: #{tpu_custom_call.1} parent=31 // pred_check_branch
          %242 = sbr.rel (%p240) target = $region40
        $region39: #{tpu_custom_call.1} parent=31 // pred_region
          %243 = dma.done [#allocation6], 5120
        $region40: #{tpu_custom_call.1} parent=31 // pred_fallthru
          _
        %s244 = sand.u32 %s35, 1
        %s245 = scalar_lea.sflag [#allocation3], %s244
        %s246 = sand.u32 %s35, 1
        %s247 = smul.addr %s246, 128
        %s248 = scalar_lea.vmem [#allocation2], %s247
        %p249 = pneg %p48
        %p250 = pneg %p45
        %p251 = pneg %p69
        %p252 = pneg %p66
        %p253 = pneg %p90
        %p254 = pneg %p87
        %p255 = pneg %p116
        %p256 = pneg %p113
        %s257 = sand.u32 %s103, 1
        %s258 = scalar_lea.sflag [#allocation4], %s257
        %s259 = sand.u32 %s103, 1
        %s260 = smul.addr %s259, 192
        %s261 = scalar_lea.vmem [#allocation7], %s260
        %p262 = pneg %p142
        %p263 = pneg %p139
        %s264 = sand.u32 %s27, 1
        %s265 = scalar_lea.sflag [#allocation9], %s264
        %s266 = sand.u32 %s129, 1
        %s267 = smul.addr %s266, 128
        %s268 = scalar_lea.vmem [#allocation8], %s267
        %p269 = pneg %p168
        %p270 = pneg %p165
        %s271 = sand.u32 %s27, 1
        %s272 = scalar_lea.sflag [#allocation9], %s271
        %s273 = sand.u32 %s155, 1
        %s274 = smul.addr %s273, 64
        %s275 = scalar_lea.vmem [#allocation10], %s274
        %s276 = smul.u32 16, %s27
        %s277 = smul.u32 16, %s27
        %s278 = smul.u32 16, %s27
        %s279 = smul.u32 16, %s27
        %v281 = vld [vmem:[%s235] sm:$0xff]
        %v282 = vld [vmem:[%s235 + $0x8] sm:$0xff]
        %v283 = vld [vmem:[%s235 + $0x10] sm:$0xff]
        %v284 = vld [vmem:[%s235 + $0x18] sm:$0xff]
        %v285 = vld [vmem:[%s235 + $0x20] sm:$0xff]
        %v286 = vld [vmem:[%s235 + $0x28] sm:$0xff]
        %v287 = vld [vmem:[%s235 + $0x30] sm:$0xff]
        %v288 = vld [vmem:[%s235 + $0x38] sm:$0xff]
        %v289 = vld [vmem:[%s235 + $0x40] sm:$0xff]
        %v290 = vld [vmem:[%s235 + $0x48] sm:$0xff]
        %v291 = vld [vmem:[%s235 + $0x50] sm:$0xff]
        %v292 = vld [vmem:[%s235 + $0x58] sm:$0xff]
        %v293 = vld [vmem:[%s235 + $0x60] sm:$0xff]
        %v294 = vld [vmem:[%s235 + $0x68] sm:$0xff]
        %v295 = vld [vmem:[%s235 + $0x70] sm:$0xff]
        %v296 = vld [vmem:[%s235 + $0x78] sm:$0xff]
        %v297 = vpack.c.bf16 %v282, %v281
        %v298 = vpack.c.bf16 %v284, %v283
        %v299 = vpack.c.bf16 %v286, %v285
        %v300 = vpack.c.bf16 %v288, %v287
        %v301 = vpack.c.bf16 %v290, %v289
        %v302 = vpack.c.bf16 %v292, %v291
        %v303 = vpack.c.bf16 %v294, %v293
        %v304 = vpack.c.bf16 %v296, %v295
        %v305 = vld [vmem:[#allocation5] sm:$0xff]
        %v306 = vld [vmem:[#allocation5 + $0x8] sm:$0xff]
        %v307 = vld [vmem:[#allocation5 + $0x10] sm:$0xf]
        %v308 = vld [vmem:[#allocation5 + $0x14] sm:$0xff]
        %v309 = vld [vmem:[#allocation5 + $0x1c] sm:$0xff]
        %v310 = vld [vmem:[#allocation5 + $0x24] sm:$0xf]
        %v311 = vld [vmem:[#allocation5 + $0x28] sm:$0xff]
        %v312 = vld [vmem:[#allocation5 + $0x30] sm:$0xff]
        %v313 = vld [vmem:[#allocation5 + $0x38] sm:$0xf]
        %v314 = vld [vmem:[#allocation5 + $0x3c] sm:$0xff]
        %v315 = vld [vmem:[#allocation5 + $0x44] sm:$0xff]
        %v316 = vld [vmem:[#allocation5 + $0x4c] sm:$0xf]
        %v317 = vld [vmem:[#allocation5 + $0x50] sm:$0xff]
        %v318 = vld [vmem:[#allocation5 + $0x58] sm:$0xff]
        %v319 = vld [vmem:[#allocation5 + $0x60] sm:$0xf]
        %v320 = vld [vmem:[#allocation5 + $0x64] sm:$0xff]
        %v321 = vld [vmem:[#allocation5 + $0x6c] sm:$0xff]
        %v322 = vld [vmem:[#allocation5 + $0x74] sm:$0xf]
        %v323 = vld [vmem:[#allocation5 + $0x78] sm:$0xff]
        %v324 = vld [vmem:[#allocation5 + $0x80] sm:$0xff]
        %v325 = vld [vmem:[#allocation5 + $0x88] sm:$0xf]
        %v326 = vld [vmem:[#allocation5 + $0x8c] sm:$0xff]
        %v327 = vld [vmem:[#allocation5 + $0x94] sm:$0xff]
        %v328 = vld [vmem:[#allocation5 + $0x9c] sm:$0xf]
        %v329 = vld [vmem:[#allocation5 + $0xa0] sm:$0xff]
        %v330 = vld [vmem:[#allocation5 + $0xa8] sm:$0xff]
        %v331 = vld [vmem:[#allocation5 + $0xb0] sm:$0xf]
        %v332 = vld [vmem:[#allocation5 + $0xb4] sm:$0xff]
        %v333 = vld [vmem:[#allocation5 + $0xbc] sm:$0xff]
        %v334 = vld [vmem:[#allocation5 + $0xc4] sm:$0xf]
        %v335 = vld [vmem:[#allocation5 + $0xc8] sm:$0xff]
        %v336 = vld [vmem:[#allocation5 + $0xd0] sm:$0xff]
        %v337 = vld [vmem:[#allocation5 + $0xd8] sm:$0xf]
        %v338 = vld [vmem:[#allocation5 + $0xdc] sm:$0xff]
        %v339 = vld [vmem:[#allocation5 + $0xe4] sm:$0xff]
        %v340 = vld [vmem:[#allocation5 + $0xec] sm:$0xf]
        %v341 = vld [vmem:[#allocation5 + $0xf0] sm:$0xff]
        %v342 = vld [vmem:[#allocation5 + $0xf8] sm:$0xff]
        %v343 = vld [vmem:[#allocation5 + $0x100] sm:$0xf]
        %v344 = vld [vmem:[#allocation5 + $0x104] sm:$0xff]
        %v345 = vld [vmem:[#allocation5 + $0x10c] sm:$0xff]
        %v346 = vld [vmem:[#allocation5 + $0x114] sm:$0xf]
        %v347 = vld [vmem:[#allocation5 + $0x118] sm:$0xff]
        %v348 = vld [vmem:[#allocation5 + $0x120] sm:$0xff]
        %v349 = vld [vmem:[#allocation5 + $0x128] sm:$0xf]
        %v350 = vld [vmem:[#allocation5 + $0x12c] sm:$0xff]
        %v351 = vld [vmem:[#allocation5 + $0x134] sm:$0xff]
        %v352 = vld [vmem:[#allocation5 + $0x13c] sm:$0xf]
        %v353 = vld [vmem:[%s2] sm:$0x1f]
        %v355 = vlaneseq
        %v356 = vshrl.u32 %v355, 7
        %v357 = vsub.s32 0, %v356
        %v358 = vrot.slane %v353, %v357
        %v359 = vlaneseq
        %v360 = vshrl.u32 %v359, 7
        %v361 = vsub.s32 1, %v360
        %v362 = vrot.slane %v353, %v361
        %v363 = vlaneseq
        %v364 = vshrl.u32 %v363, 7
        %v365 = vsub.s32 2, %v364
        %v366 = vrot.slane %v353, %v365
        %v367 = vlaneseq
        %v368 = vshrl.u32 %v367, 7
        %v369 = vsub.s32 3, %v368
        %v370 = vrot.slane %v353, %v369
        %v371 = vlaneseq
        %v372 = vshrl.u32 %v371, 7
        %v373 = vsub.s32 4, %v372
        %v374 = vrot.slane %v353, %v373
        %v428 = vunpack.c.l.b16 %v305
        %v429 = vunpack.c.h.b16 %v305
        %v430 = vunpack.c.l.b16 %v306
        %v431 = vunpack.c.h.b16 %v306
        %v432 = vunpack.c.l.b16 %v307
        %v433 = vunpack.c.l.b16 %v308
        %v434 = vunpack.c.h.b16 %v308
        %v435 = vunpack.c.l.b16 %v309
        %v436 = vunpack.c.h.b16 %v309
        %v437 = vunpack.c.l.b16 %v310
        %v438 = vunpack.c.l.b16 %v311
        %v439 = vunpack.c.h.b16 %v311
        %v440 = vunpack.c.l.b16 %v312
        %v441 = vunpack.c.h.b16 %v312
        %v442 = vunpack.c.l.b16 %v313
        %v443 = vunpack.c.l.b16 %v314
        %v444 = vunpack.c.h.b16 %v314
        %v445 = vunpack.c.l.b16 %v315
        %v446 = vunpack.c.h.b16 %v315
        %v447 = vunpack.c.l.b16 %v316
        %v448 = vunpack.c.l.b16 %v317
        %v449 = vunpack.c.h.b16 %v317
        %v450 = vunpack.c.l.b16 %v318
        %v451 = vunpack.c.h.b16 %v318
        %v452 = vunpack.c.l.b16 %v319
        %v453 = vunpack.c.l.b16 %v320
        %v454 = vunpack.c.h.b16 %v320
        %v455 = vunpack.c.l.b16 %v321
        %v456 = vunpack.c.h.b16 %v321
        %v457 = vunpack.c.l.b16 %v322
        %v458 = vunpack.c.l.b16 %v323
        %v459 = vunpack.c.h.b16 %v323
        %v460 = vunpack.c.l.b16 %v324
        %v461 = vunpack.c.h.b16 %v324
        %v462 = vunpack.c.l.b16 %v325
        %v463 = vunpack.c.l.b16 %v326
        %v464 = vunpack.c.h.b16 %v326
        %v465 = vunpack.c.l.b16 %v327
        %v466 = vunpack.c.h.b16 %v327
        %v467 = vunpack.c.l.b16 %v328
        %v468 = vunpack.c.l.b16 %v329
        %v469 = vunpack.c.h.b16 %v329
        %v470 = vunpack.c.l.b16 %v330
        %v471 = vunpack.c.h.b16 %v330
        %v472 = vunpack.c.l.b16 %v331
        %v473 = vunpack.c.l.b16 %v332
        %v474 = vunpack.c.h.b16 %v332
        %v475 = vunpack.c.l.b16 %v333
        %v476 = vunpack.c.h.b16 %v333
        %v477 = vunpack.c.l.b16 %v334
        %v478 = vunpack.c.l.b16 %v335
        %v479 = vunpack.c.h.b16 %v335
        %v480 = vunpack.c.l.b16 %v336
        %v481 = vunpack.c.h.b16 %v336
        %v482 = vunpack.c.l.b16 %v337
        %v483 = vunpack.c.l.b16 %v338
        %v484 = vunpack.c.h.b16 %v338
        %v485 = vunpack.c.l.b16 %v339
        %v486 = vunpack.c.h.b16 %v339
        %v487 = vunpack.c.l.b16 %v340
        %v488 = vunpack.c.l.b16 %v341
        %v489 = vunpack.c.h.b16 %v341
        %v490 = vunpack.c.l.b16 %v342
        %v491 = vunpack.c.h.b16 %v342
        %v492 = vunpack.c.l.b16 %v343
        %v493 = vunpack.c.l.b16 %v344
        %v494 = vunpack.c.h.b16 %v344
        %v495 = vunpack.c.l.b16 %v345
        %v496 = vunpack.c.h.b16 %v345
        %v497 = vunpack.c.l.b16 %v346
        %v498 = vunpack.c.l.b16 %v347
        %v499 = vunpack.c.h.b16 %v347
        %v500 = vunpack.c.l.b16 %v348
        %v501 = vunpack.c.h.b16 %v348
        %v502 = vunpack.c.l.b16 %v349
        %v503 = vunpack.c.l.b16 %v350
        %v504 = vunpack.c.h.b16 %v350
        %v505 = vunpack.c.l.b16 %v351
        %v506 = vunpack.c.h.b16 %v351
        %v507 = vunpack.c.l.b16 %v352
        %v508 = vpack.c.b16 %v433, %v428
        %v509 = vpack.c.b16 %v434, %v429
        %v510 = vpack.c.b16 %v435, %v430
        %v511 = vpack.c.b16 %v436, %v431
        %v512 = vpack.c.b16 %v437, %v432
        %v513 = vpack.c.b16 %v443, %v438
        %v514 = vpack.c.b16 %v444, %v439
        %v515 = vpack.c.b16 %v445, %v440
        %v516 = vpack.c.b16 %v446, %v441
        %v517 = vpack.c.b16 %v447, %v442
        %v518 = vpack.c.b16 %v453, %v448
        %v519 = vpack.c.b16 %v454, %v449
        %v520 = vpack.c.b16 %v455, %v450
        %v521 = vpack.c.b16 %v456, %v451
        %v522 = vpack.c.b16 %v457, %v452
        %v523 = vpack.c.b16 %v463, %v458
        %v524 = vpack.c.b16 %v464, %v459
        %v525 = vpack.c.b16 %v465, %v460
        %v526 = vpack.c.b16 %v466, %v461
        %v527 = vpack.c.b16 %v467, %v462
        %v528 = vpack.c.b16 %v473, %v468
        %v529 = vpack.c.b16 %v474, %v469
        %v530 = vpack.c.b16 %v475, %v470
        %v531 = vpack.c.b16 %v476, %v471
        %v532 = vpack.c.b16 %v477, %v472
        %v533 = vpack.c.b16 %v483, %v478
        %v534 = vpack.c.b16 %v484, %v479
        %v535 = vpack.c.b16 %v485, %v480
        %v536 = vpack.c.b16 %v486, %v481
        %v537 = vpack.c.b16 %v487, %v482
        %v538 = vpack.c.b16 %v493, %v488
        %v539 = vpack.c.b16 %v494, %v489
        %v540 = vpack.c.b16 %v495, %v490
        %v541 = vpack.c.b16 %v496, %v491
        %v542 = vpack.c.b16 %v497, %v492
        %v543 = vpack.c.b16 %v503, %v498
        %v544 = vpack.c.b16 %v504, %v499
        %v545 = vpack.c.b16 %v505, %v500
        %v546 = vpack.c.b16 %v506, %v501
        %v547 = vpack.c.b16 %v507, %v502
        %588 = vmatprep.subr.bf16.mxu0 %v509
        %589 = vmatpush1.bf16.msra.mxu0 %v508
        %590 = vmatprep.subr.bf16.mxu0 %v514
        %591 = vmatpush1.bf16.msra.mxu0 %v513
        %592 = vmatprep.subr.bf16.mxu0 %v519
        %593 = vmatpush1.bf16.msra.mxu0 %v518
        %594 = vmatprep.subr.bf16.mxu0 %v524
        %595 = vmatpush1.bf16.msra.mxu0 %v523
        %596 = vmatprep.subr.bf16.mxu0 %v529
        %597 = vmatpush1.bf16.msra.mxu0 %v528
        %598 = vmatprep.subr.bf16.mxu0 %v534
        %599 = vmatpush1.bf16.msra.mxu0 %v533
        %600 = vmatprep.subr.bf16.mxu0 %v539
        %601 = vmatpush1.bf16.msra.mxu0 %v538
        %602 = vmatprep.subr.bf16.mxu0 %v544
        %603 = vmatpush1.bf16.msra.mxu0 %v543
        %604 = vmatprep.subr.bf16.mxu0 0
        %605 = vmatpush1.bf16.msra.mxu0 0
        %606 = vmatprep.subr.bf16.mxu0 0
        %607 = vmatpush1.bf16.msra.mxu0 0
        %608 = vmatprep.subr.bf16.mxu0 0
        %609 = vmatpush1.bf16.msra.mxu0 0
        %610 = vmatprep.subr.bf16.mxu0 0
        %611 = vmatpush1.bf16.msra.mxu0 0
        %612 = vmatprep.subr.bf16.mxu0 0
        %613 = vmatpush1.bf16.msra.mxu0 0
        %614 = vmatprep.subr.bf16.mxu0 0
        %615 = vmatpush1.bf16.msra.mxu0 0
        %616 = vmatprep.subr.bf16.mxu0 0
        %617 = vmatpush1.bf16.msra.mxu0 0
        %618 = vmatprep.subr.bf16.mxu0 0
        %619 = vmatpush1.bf16.msra.mxu0 0
        %620 = vmatprep.mubr.bf16.mxu0 0
        %621 = vmatmul.mubr.bf16.gmra.mrb[0].mxu0 %v297
        %v622 = vpop.f32.mrb[0].mxu0
        %v623 = vadd.f32 %v358, %v622
        %v624 = vpop.f32.mrb[0].mxu0
        %v625 = vadd.f32 %v362, %v624
        %v626 = vpop.f32.mrb[0].mxu0
        %v627 = vadd.f32 %v358, %v626
        %v628 = vpop.f32.mrb[0].mxu0
        %v629 = vadd.f32 %v362, %v628
        %630 = vmatprep.mubr.bf16.mxu0 0
        %631 = vmatmul.mubr.bf16.gmra.mrb[0].mxu0 %v298
        %v632 = vpop.f32.mrb[0].mxu0
        %v633 = vadd.f32 %v358, %v632
        %v634 = vpop.f32.mrb[0].mxu0
        %v635 = vadd.f32 %v362, %v634
        %v636 = vpop.f32.mrb[0].mxu0
        %v637 = vadd.f32 %v358, %v636
        %v638 = vpop.f32.mrb[0].mxu0
        %v639 = vadd.f32 %v362, %v638
        %640 = vmatprep.mubr.bf16.mxu0 0
        %641 = vmatmul.mubr.bf16.gmra.mrb[0].mxu0 %v299
        %v642 = vpop.f32.mrb[0].mxu0
        %v643 = vadd.f32 %v358, %v642
        %v644 = vpop.f32.mrb[0].mxu0
        %v645 = vadd.f32 %v362, %v644
        %v646 = vpop.f32.mrb[0].mxu0
        %v647 = vadd.f32 %v358, %v646
        %v648 = vpop.f32.mrb[0].mxu0
        %v649 = vadd.f32 %v362, %v648
        %650 = vmatprep.mubr.bf16.mxu0 0
        %651 = vmatmul.mubr.bf16.gmra.mrb[0].mxu0 %v300
        %v652 = vpop.f32.mrb[0].mxu0
        %v653 = vadd.f32 %v358, %v652
        %v654 = vpop.f32.mrb[0].mxu0
        %v655 = vadd.f32 %v362, %v654
        %v656 = vpop.f32.mrb[0].mxu0
        %v657 = vadd.f32 %v358, %v656
        %v658 = vpop.f32.mrb[0].mxu0
        %v659 = vadd.f32 %v362, %v658
        %660 = vmatprep.mubr.bf16.mxu0 0
        %661 = vmatmul.mubr.bf16.gmra.mrb[0].mxu0 %v301
        %v662 = vpop.f32.mrb[0].mxu0
        %v663 = vadd.f32 %v358, %v662
        %v664 = vpop.f32.mrb[0].mxu0
        %v665 = vadd.f32 %v362, %v664
        %v666 = vpop.f32.mrb[0].mxu0
        %v667 = vadd.f32 %v358, %v666
        %v668 = vpop.f32.mrb[0].mxu0
        %v669 = vadd.f32 %v362, %v668
        %670 = vmatprep.mubr.bf16.mxu0 0
        %671 = vmatmul.mubr.bf16.gmra.mrb[0].mxu0 %v302
        %v672 = vpop.f32.mrb[0].mxu0
        %v673 = vadd.f32 %v358, %v672
        %v674 = vpop.f32.mrb[0].mxu0
        %v675 = vadd.f32 %v362, %v674
        %v676 = vpop.f32.mrb[0].mxu0
        %v677 = vadd.f32 %v358, %v676
        %v678 = vpop.f32.mrb[0].mxu0
        %v679 = vadd.f32 %v362, %v678
        %680 = vmatprep.mubr.bf16.mxu0 0
        %681 = vmatmul.mubr.bf16.gmra.mrb[0].mxu0 %v303
        %v682 = vpop.f32.mrb[0].mxu0
        %v683 = vadd.f32 %v358, %v682
        %v684 = vpop.f32.mrb[0].mxu0
        %v685 = vadd.f32 %v362, %v684
        %v686 = vpop.f32.mrb[0].mxu0
        %v687 = vadd.f32 %v358, %v686
        %v688 = vpop.f32.mrb[0].mxu0
        %v689 = vadd.f32 %v362, %v688
        %690 = vmatprep.mubr.bf16.mxu0 0
        %691 = vmatmul.mubr.bf16.gmra.mrb[0].mxu0 %v304
        %v692 = vpop.f32.mrb[0].mxu0
        %v693 = vadd.f32 %v358, %v692
        %v694 = vpop.f32.mrb[0].mxu0
        %v695 = vadd.f32 %v362, %v694
        %v696 = vpop.f32.mrb[0].mxu0
        %v697 = vadd.f32 %v358, %v696
        %v698 = vpop.f32.mrb[0].mxu0
        %v699 = vadd.f32 %v362, %v698
        %700 = vdwg.mxu0
        %701 = vmatprep.subr.bf16.mxu0 %v511
        %702 = vmatpush1.bf16.msra.mxu0 %v510
        %703 = vmatprep.subr.bf16.mxu0 %v516
        %704 = vmatpush1.bf16.msra.mxu0 %v515
        %705 = vmatprep.subr.bf16.mxu0 %v521
        %706 = vmatpush1.bf16.msra.mxu0 %v520
        %707 = vmatprep.subr.bf16.mxu0 %v526
        %708 = vmatpush1.bf16.msra.mxu0 %v525
        %709 = vmatprep.subr.bf16.mxu0 %v531
        %710 = vmatpush1.bf16.msra.mxu0 %v530
        %711 = vmatprep.subr.bf16.mxu0 %v536
        %712 = vmatpush1.bf16.msra.mxu0 %v535
        %713 = vmatprep.subr.bf16.mxu0 %v541
        %714 = vmatpush1.bf16.msra.mxu0 %v540
        %715 = vmatprep.subr.bf16.mxu0 %v546
        %716 = vmatpush1.bf16.msra.mxu0 %v545
        %717 = vmatprep.subr.bf16.mxu0 0
        %718 = vmatpush1.bf16.msra.mxu0 0
        %719 = vmatprep.subr.bf16.mxu0 0
        %720 = vmatpush1.bf16.msra.mxu0 0
        %721 = vmatprep.subr.bf16.mxu0 0
        %722 = vmatpush1.bf16.msra.mxu0 0
        %723 = vmatprep.subr.bf16.mxu0 0
        %724 = vmatpush1.bf16.msra.mxu0 0
        %725 = vmatprep.subr.bf16.mxu0 0
        %726 = vmatpush1.bf16.msra.mxu0 0
        %727 = vmatprep.subr.bf16.mxu0 0
        %728 = vmatpush1.bf16.msra.mxu0 0
        %729 = vmatprep.subr.bf16.mxu0 0
        %730 = vmatpush1.bf16.msra.mxu0 0
        %731 = vmatprep.subr.bf16.mxu0 0
        %732 = vmatpush1.bf16.msra.mxu0 0
        %733 = vmatprep.mubr.bf16.mxu0 0
        %734 = vmatmul.mubr.bf16.gmra.mrb[0].mxu0 %v297
        %v735 = vpop.f32.mrb[0].mxu0
        %v736 = vadd.f32 %v366, %v735
        %v737 = vpop.f32.mrb[0].mxu0
        %v738 = vadd.f32 %v370, %v737
        %v739 = vpop.f32.mrb[0].mxu0
        %v740 = vadd.f32 %v366, %v739
        %v741 = vpop.f32.mrb[0].mxu0
        %v742 = vadd.f32 %v370, %v741
        %743 = vmatprep.mubr.bf16.mxu0 0
        %744 = vmatmul.mubr.bf16.gmra.mrb[0].mxu0 %v298
        %v745 = vpop.f32.mrb[0].mxu0
        %v746 = vadd.f32 %v366, %v745
        %v747 = vpop.f32.mrb[0].mxu0
        %v748 = vadd.f32 %v370, %v747
        %v749 = vpop.f32.mrb[0].mxu0
        %v750 = vadd.f32 %v366, %v749
        %v751 = vpop.f32.mrb[0].mxu0
        %v752 = vadd.f32 %v370, %v751
        %753 = vmatprep.mubr.bf16.mxu0 0
        %754 = vmatmul.mubr.bf16.gmra.mrb[0].mxu0 %v299
        %v755 = vpop.f32.mrb[0].mxu0
        %v756 = vadd.f32 %v366, %v755
        %v757 = vpop.f32.mrb[0].mxu0
        %v758 = vadd.f32 %v370, %v757
        %v759 = vpop.f32.mrb[0].mxu0
        %v760 = vadd.f32 %v366, %v759
        %v761 = vpop.f32.mrb[0].mxu0
        %v762 = vadd.f32 %v370, %v761
        %763 = vmatprep.mubr.bf16.mxu0 0
        %764 = vmatmul.mubr.bf16.gmra.mrb[0].mxu0 %v300
        %v765 = vpop.f32.mrb[0].mxu0
        %v766 = vadd.f32 %v366, %v765
        %v767 = vpop.f32.mrb[0].mxu0
        %v768 = vadd.f32 %v370, %v767
        %v769 = vpop.f32.mrb[0].mxu0
        %v770 = vadd.f32 %v366, %v769
        %v771 = vpop.f32.mrb[0].mxu0
        %v772 = vadd.f32 %v370, %v771
        %773 = vmatprep.mubr.bf16.mxu0 0
        %774 = vmatmul.mubr.bf16.gmra.mrb[0].mxu0 %v301
        %v775 = vpop.f32.mrb[0].mxu0
        %v776 = vadd.f32 %v366, %v775
        %v777 = vpop.f32.mrb[0].mxu0
        %v778 = vadd.f32 %v370, %v777
        %v779 = vpop.f32.mrb[0].mxu0
        %v780 = vadd.f32 %v366, %v779
        %v781 = vpop.f32.mrb[0].mxu0
        %v782 = vadd.f32 %v370, %v781
        %783 = vmatprep.mubr.bf16.mxu0 0
        %784 = vmatmul.mubr.bf16.gmra.mrb[0].mxu0 %v302
        %v785 = vpop.f32.mrb[0].mxu0
        %v786 = vadd.f32 %v366, %v785
        %v787 = vpop.f32.mrb[0].mxu0
        %v788 = vadd.f32 %v370, %v787
        %v789 = vpop.f32.mrb[0].mxu0
        %v790 = vadd.f32 %v366, %v789
        %v791 = vpop.f32.mrb[0].mxu0
        %v792 = vadd.f32 %v370, %v791
        %793 = vmatprep.mubr.bf16.mxu0 0
        %794 = vmatmul.mubr.bf16.gmra.mrb[0].mxu0 %v303
        %v795 = vpop.f32.mrb[0].mxu0
        %v796 = vadd.f32 %v366, %v795
        %v797 = vpop.f32.mrb[0].mxu0
        %v798 = vadd.f32 %v370, %v797
        %v799 = vpop.f32.mrb[0].mxu0
        %v800 = vadd.f32 %v366, %v799
        %v801 = vpop.f32.mrb[0].mxu0
        %v802 = vadd.f32 %v370, %v801
        %803 = vmatprep.mubr.bf16.mxu0 0
        %804 = vmatmul.mubr.bf16.gmra.mrb[0].mxu0 %v304
        %v805 = vpop.f32.mrb[0].mxu0
        %v806 = vadd.f32 %v366, %v805
        %v807 = vpop.f32.mrb[0].mxu0
        %v808 = vadd.f32 %v370, %v807
        %v809 = vpop.f32.mrb[0].mxu0
        %v810 = vadd.f32 %v366, %v809
        %v811 = vpop.f32.mrb[0].mxu0
        %v812 = vadd.f32 %v370, %v811
        %813 = vdwg.mxu0
        %814 = vmatprep.subr.bf16.mxu0 0
        %815 = vmatpush1.bf16.msra.mxu0 %v512
        %816 = vmatprep.subr.bf16.mxu0 0
        %817 = vmatpush1.bf16.msra.mxu0 %v517
        %818 = vmatprep.subr.bf16.mxu0 0
        %819 = vmatpush1.bf16.msra.mxu0 %v522
        %820 = vmatprep.subr.bf16.mxu0 0
        %821 = vmatpush1.bf16.msra.mxu0 %v527
        %822 = vmatprep.subr.bf16.mxu0 0
        %823 = vmatpush1.bf16.msra.mxu0 %v532
        %824 = vmatprep.subr.bf16.mxu0 0
        %825 = vmatpush1.bf16.msra.mxu0 %v537
        %826 = vmatprep.subr.bf16.mxu0 0
        %827 = vmatpush1.bf16.msra.mxu0 %v542
        %828 = vmatprep.subr.bf16.mxu0 0
        %829 = vmatpush1.bf16.msra.mxu0 %v547
        %830 = vmatprep.subr.bf16.mxu0 0
        %831 = vmatpush1.bf16.msra.mxu0 0
        %832 = vmatprep.subr.bf16.mxu0 0
        %833 = vmatpush1.bf16.msra.mxu0 0
        %834 = vmatprep.subr.bf16.mxu0 0
        %835 = vmatpush1.bf16.msra.mxu0 0
        %836 = vmatprep.subr.bf16.mxu0 0
        %837 = vmatpush1.bf16.msra.mxu0 0
        %838 = vmatprep.subr.bf16.mxu0 0
        %839 = vmatpush1.bf16.msra.mxu0 0
        %840 = vmatprep.subr.bf16.mxu0 0
        %841 = vmatpush1.bf16.msra.mxu0 0
        %842 = vmatprep.subr.bf16.mxu0 0
        %843 = vmatpush1.bf16.msra.mxu0 0
        %844 = vmatprep.subr.bf16.mxu0 0
        %845 = vmatpush1.bf16.msra.mxu0 0
        %846 = vmatprep.mubr.bf16.mxu0 0
        %847 = vmatmul.mubr.bf16.gmra.mrb[0].mxu0 %v297
        %v848 = vpop.f32.mrb[0].mxu0
        %v849 = vadd.f32 %v374, %v848
        %v850 = vpop.f32.mrb[0].mxu0
        %v851 = vpop.f32.mrb[0].mxu0
        %v852 = vadd.f32 %v374, %v851
        %v853 = vpop.f32.mrb[0].mxu0
        %854 = vmatprep.mubr.bf16.mxu0 0
        %855 = vmatmul.mubr.bf16.gmra.mrb[0].mxu0 %v298
        %v856 = vpop.f32.mrb[0].mxu0
        %v857 = vadd.f32 %v374, %v856
        %v858 = vpop.f32.mrb[0].mxu0
        %v859 = vpop.f32.mrb[0].mxu0
        %v860 = vadd.f32 %v374, %v859
        %v861 = vpop.f32.mrb[0].mxu0
        %862 = vmatprep.mubr.bf16.mxu0 0
        %863 = vmatmul.mubr.bf16.gmra.mrb[0].mxu0 %v299
        %v864 = vpop.f32.mrb[0].mxu0
        %v865 = vadd.f32 %v374, %v864
        %v866 = vpop.f32.mrb[0].mxu0
        %v867 = vpop.f32.mrb[0].mxu0
        %v868 = vadd.f32 %v374, %v867
        %v869 = vpop.f32.mrb[0].mxu0
        %870 = vmatprep.mubr.bf16.mxu0 0
        %871 = vmatmul.mubr.bf16.gmra.mrb[0].mxu0 %v300
        %v872 = vpop.f32.mrb[0].mxu0
        %v873 = vadd.f32 %v374, %v872
        %v874 = vpop.f32.mrb[0].mxu0
        %v875 = vpop.f32.mrb[0].mxu0
        %v876 = vadd.f32 %v374, %v875
        %v877 = vpop.f32.mrb[0].mxu0
        %878 = vmatprep.mubr.bf16.mxu0 0
        %879 = vmatmul.mubr.bf16.gmra.mrb[0].mxu0 %v301
        %v880 = vpop.f32.mrb[0].mxu0
        %v881 = vadd.f32 %v374, %v880
        %v882 = vpop.f32.mrb[0].mxu0
        %v883 = vpop.f32.mrb[0].mxu0
        %v884 = vadd.f32 %v374, %v883
        %v885 = vpop.f32.mrb[0].mxu0
        %886 = vmatprep.mubr.bf16.mxu0 0
        %887 = vmatmul.mubr.bf16.gmra.mrb[0].mxu0 %v302
        %v888 = vpop.f32.mrb[0].mxu0
        %v889 = vadd.f32 %v374, %v888
        %v890 = vpop.f32.mrb[0].mxu0
        %v891 = vpop.f32.mrb[0].mxu0
        %v892 = vadd.f32 %v374, %v891
        %v893 = vpop.f32.mrb[0].mxu0
        %894 = vmatprep.mubr.bf16.mxu0 0
        %895 = vmatmul.mubr.bf16.gmra.mrb[0].mxu0 %v303
        %v896 = vpop.f32.mrb[0].mxu0
        %v897 = vadd.f32 %v374, %v896
        %v898 = vpop.f32.mrb[0].mxu0
        %v899 = vpop.f32.mrb[0].mxu0
        %v900 = vadd.f32 %v374, %v899
        %v901 = vpop.f32.mrb[0].mxu0
        %902 = vmatprep.mubr.bf16.mxu0 0
        %903 = vmatmul.mubr.bf16.gmra.mrb[0].mxu0 %v304
        %v904 = vpop.f32.mrb[0].mxu0
        %v905 = vadd.f32 %v374, %v904
        %v906 = vpop.f32.mrb[0].mxu0
        %v907 = vpop.f32.mrb[0].mxu0
        %v908 = vadd.f32 %v374, %v907
        %v909 = vpop.f32.mrb[0].mxu0
        %910 = vdwg.mxu0
        %v911 = vpack.c.bf16 %v627, %v623
        %v912 = vpack.c.bf16 %v629, %v625
        %v913 = vpack.c.bf16 %v740, %v736
        %v914 = vpack.c.bf16 %v637, %v633
        %v915 = vpack.c.bf16 %v639, %v635
        %v916 = vpack.c.bf16 %v750, %v746
        %v917 = vpack.c.bf16 %v647, %v643
        %v918 = vpack.c.bf16 %v649, %v645
        %v919 = vpack.c.bf16 %v760, %v756
        %v920 = vpack.c.bf16 %v657, %v653
        %v921 = vpack.c.bf16 %v659, %v655
        %v922 = vpack.c.bf16 %v770, %v766
        %v923 = vpack.c.bf16 %v667, %v663
        %v924 = vpack.c.bf16 %v669, %v665
        %v925 = vpack.c.bf16 %v780, %v776
        %v926 = vpack.c.bf16 %v677, %v673
        %v927 = vpack.c.bf16 %v679, %v675
        %v928 = vpack.c.bf16 %v790, %v786
        %v929 = vpack.c.bf16 %v687, %v683
        %v930 = vpack.c.bf16 %v689, %v685
        %v931 = vpack.c.bf16 %v800, %v796
        %v932 = vpack.c.bf16 %v697, %v693
        %v933 = vpack.c.bf16 %v699, %v695
        %v934 = vpack.c.bf16 %v810, %v806
        %v959 = vunpack.c.l.b16 %v911
        %v960 = vunpack.c.l.b16 %v912
        %v961 = vunpack.c.l.b16 %v913
        %v962 = vunpack.c.h.b16 %v911
        %v963 = vunpack.c.h.b16 %v912
        %v964 = vunpack.c.h.b16 %v913
        %v965 = vunpack.c.l.b16 %v914
        %v966 = vunpack.c.l.b16 %v915
        %v967 = vunpack.c.l.b16 %v916
        %v968 = vunpack.c.h.b16 %v914
        %v969 = vunpack.c.h.b16 %v915
        %v970 = vunpack.c.h.b16 %v916
        %v971 = vunpack.c.l.b16 %v917
        %v972 = vunpack.c.l.b16 %v918
        %v973 = vunpack.c.l.b16 %v919
        %v974 = vunpack.c.h.b16 %v917
        %v975 = vunpack.c.h.b16 %v918
        %v976 = vunpack.c.h.b16 %v919
        %v977 = vunpack.c.l.b16 %v920
        %v978 = vunpack.c.l.b16 %v921
        %v979 = vunpack.c.l.b16 %v922
        %v980 = vunpack.c.h.b16 %v920
        %v981 = vunpack.c.h.b16 %v921
        %v982 = vunpack.c.h.b16 %v922
        %v983 = vunpack.c.l.b16 %v923
        %v984 = vunpack.c.l.b16 %v924
        %v985 = vunpack.c.l.b16 %v925
        %v986 = vunpack.c.h.b16 %v923
        %v987 = vunpack.c.h.b16 %v924
        %v988 = vunpack.c.h.b16 %v925
        %v989 = vunpack.c.l.b16 %v926
        %v990 = vunpack.c.l.b16 %v927
        %v991 = vunpack.c.l.b16 %v928
        %v992 = vunpack.c.h.b16 %v926
        %v993 = vunpack.c.h.b16 %v927
        %v994 = vunpack.c.h.b16 %v928
        %v995 = vunpack.c.l.b16 %v929
        %v996 = vunpack.c.l.b16 %v930
        %v997 = vunpack.c.l.b16 %v931
        %v998 = vunpack.c.h.b16 %v929
        %v999 = vunpack.c.h.b16 %v930
        %v1000 = vunpack.c.h.b16 %v931
        %v1001 = vunpack.c.l.b16 %v932
        %v1002 = vunpack.c.l.b16 %v933
        %v1003 = vunpack.c.l.b16 %v934
        %v1004 = vunpack.c.h.b16 %v932
        %v1005 = vunpack.c.h.b16 %v933
        %v1006 = vunpack.c.h.b16 %v934
        %v1007 = vpack.c.b16 %v960, %v959
        %v1008 = vpack.c.b16 %v961, %v961
        %v1009 = vpack.c.b16 %v963, %v962
        %v1010 = vpack.c.b16 %v964, %v964
        %v1011 = vpack.c.b16 %v966, %v965
        %v1012 = vpack.c.b16 %v967, %v967
        %v1013 = vpack.c.b16 %v969, %v968
        %v1014 = vpack.c.b16 %v970, %v970
        %v1015 = vpack.c.b16 %v972, %v971
        %v1016 = vpack.c.b16 %v973, %v973
        %v1017 = vpack.c.b16 %v975, %v974
        %v1018 = vpack.c.b16 %v976, %v976
        %v1019 = vpack.c.b16 %v978, %v977
        %v1020 = vpack.c.b16 %v979, %v979
        %v1021 = vpack.c.b16 %v981, %v980
        %v1022 = vpack.c.b16 %v982, %v982
        %v1023 = vpack.c.b16 %v984, %v983
        %v1024 = vpack.c.b16 %v985, %v985
        %v1025 = vpack.c.b16 %v987, %v986
        %v1026 = vpack.c.b16 %v988, %v988
        %v1027 = vpack.c.b16 %v990, %v989
        %v1028 = vpack.c.b16 %v991, %v991
        %v1029 = vpack.c.b16 %v993, %v992
        %v1030 = vpack.c.b16 %v994, %v994
        %v1031 = vpack.c.b16 %v996, %v995
        %v1032 = vpack.c.b16 %v997, %v997
        %v1033 = vpack.c.b16 %v999, %v998
        %v1034 = vpack.c.b16 %v1000, %v1000
        %v1035 = vpack.c.b16 %v1002, %v1001
        %v1036 = vpack.c.b16 %v1003, %v1003
        %v1037 = vpack.c.b16 %v1005, %v1004
        %v1038 = vpack.c.b16 %v1006, %v1006
        %1071 = vst [vmem:[%s261] sm:$0xff] %v1007
        %1072 = vst [vmem:[%s261 + $0x8] sm:$0xf] %v1008
        %1073 = vst [vmem:[%s261 + $0xc] sm:$0xff] %v1009
        %1074 = vst [vmem:[%s261 + $0x14] sm:$0xf] %v1010
        %1075 = vst [vmem:[%s261 + $0x18] sm:$0xff] %v1011
        %1076 = vst [vmem:[%s261 + $0x20] sm:$0xf] %v1012
        %1077 = vst [vmem:[%s261 + $0x24] sm:$0xff] %v1013
        %1078 = vst [vmem:[%s261 + $0x2c] sm:$0xf] %v1014
        %1079 = vst [vmem:[%s261 + $0x30] sm:$0xff] %v1015
        %1080 = vst [vmem:[%s261 + $0x38] sm:$0xf] %v1016
        %1081 = vst [vmem:[%s261 + $0x3c] sm:$0xff] %v1017
        %1082 = vst [vmem:[%s261 + $0x44] sm:$0xf] %v1018
        %1083 = vst [vmem:[%s261 + $0x48] sm:$0xff] %v1019
        %1084 = vst [vmem:[%s261 + $0x50] sm:$0xf] %v1020
        %1085 = vst [vmem:[%s261 + $0x54] sm:$0xff] %v1021
        %1086 = vst [vmem:[%s261 + $0x5c] sm:$0xf] %v1022
        %1087 = vst [vmem:[%s261 + $0x60] sm:$0xff] %v1023
        %1088 = vst [vmem:[%s261 + $0x68] sm:$0xf] %v1024
        %1089 = vst [vmem:[%s261 + $0x6c] sm:$0xff] %v1025
        %1090 = vst [vmem:[%s261 + $0x74] sm:$0xf] %v1026
        %1091 = vst [vmem:[%s261 + $0x78] sm:$0xff] %v1027
        %1092 = vst [vmem:[%s261 + $0x80] sm:$0xf] %v1028
        %1093 = vst [vmem:[%s261 + $0x84] sm:$0xff] %v1029
        %1094 = vst [vmem:[%s261 + $0x8c] sm:$0xf] %v1030
        %1095 = vst [vmem:[%s261 + $0x90] sm:$0xff] %v1031
        %1096 = vst [vmem:[%s261 + $0x98] sm:$0xf] %v1032
        %1097 = vst [vmem:[%s261 + $0x9c] sm:$0xff] %v1033
        %1098 = vst [vmem:[%s261 + $0xa4] sm:$0xf] %v1034
        %1099 = vst [vmem:[%s261 + $0xa8] sm:$0xff] %v1035
        %1100 = vst [vmem:[%s261 + $0xb0] sm:$0xf] %v1036
        %1101 = vst [vmem:[%s261 + $0xb4] sm:$0xff] %v1037
        %1102 = vst [vmem:[%s261 + $0xbc] sm:$0xf] %v1038
        %1103 = vst [vmem:[%s268] sm:$0xff] %v738
        %1104 = vst [vmem:[%s268 + $0x8] sm:$0xff] %v742
        %1105 = vst [vmem:[%s268 + $0x10] sm:$0xff] %v748
        %1106 = vst [vmem:[%s268 + $0x18] sm:$0xff] %v752
        %1107 = vst [vmem:[%s268 + $0x20] sm:$0xff] %v758
        %1108 = vst [vmem:[%s268 + $0x28] sm:$0xff] %v762
        %1109 = vst [vmem:[%s268 + $0x30] sm:$0xff] %v768
        %1110 = vst [vmem:[%s268 + $0x38] sm:$0xff] %v772
        %1111 = vst [vmem:[%s268 + $0x40] sm:$0xff] %v778
        %1112 = vst [vmem:[%s268 + $0x48] sm:$0xff] %v782
        %1113 = vst [vmem:[%s268 + $0x50] sm:$0xff] %v788
        %1114 = vst [vmem:[%s268 + $0x58] sm:$0xff] %v792
        %1115 = vst [vmem:[%s268 + $0x60] sm:$0xff] %v798
        %1116 = vst [vmem:[%s268 + $0x68] sm:$0xff] %v802
        %1117 = vst [vmem:[%s268 + $0x70] sm:$0xff] %v808
        %1118 = vst [vmem:[%s268 + $0x78] sm:$0xff] %v812
        %v1119 = vpack.c.bf16 %v852, %v849
        %v1120 = vpack.c.bf16 %v860, %v857
        %v1121 = vpack.c.bf16 %v868, %v865
        %v1122 = vpack.c.bf16 %v876, %v873
        %v1123 = vpack.c.bf16 %v884, %v881
        %v1124 = vpack.c.bf16 %v892, %v889
        %v1125 = vpack.c.bf16 %v900, %v897
        %v1126 = vpack.c.bf16 %v908, %v905
        %v1135 = vunpack.c.l.b16 %v1119
        %v1136 = vunpack.c.h.b16 %v1119
        %v1137 = vunpack.c.l.b16 %v1120
        %v1138 = vunpack.c.h.b16 %v1120
        %v1139 = vunpack.c.l.b16 %v1121
        %v1140 = vunpack.c.h.b16 %v1121
        %v1141 = vunpack.c.l.b16 %v1122
        %v1142 = vunpack.c.h.b16 %v1122
        %v1143 = vunpack.c.l.b16 %v1123
        %v1144 = vunpack.c.h.b16 %v1123
        %v1145 = vunpack.c.l.b16 %v1124
        %v1146 = vunpack.c.h.b16 %v1124
        %v1147 = vunpack.c.l.b16 %v1125
        %v1148 = vunpack.c.h.b16 %v1125
        %v1149 = vunpack.c.l.b16 %v1126
        %v1150 = vunpack.c.h.b16 %v1126
        %v1151 = vpack.c.b16 %v1135, %v1135
        %v1152 = vpack.c.b16 %v1136, %v1136
        %v1153 = vpack.c.b16 %v1137, %v1137
        %v1154 = vpack.c.b16 %v1138, %v1138
        %v1155 = vpack.c.b16 %v1139, %v1139
        %v1156 = vpack.c.b16 %v1140, %v1140
        %v1157 = vpack.c.b16 %v1141, %v1141
        %v1158 = vpack.c.b16 %v1142, %v1142
        %v1159 = vpack.c.b16 %v1143, %v1143
        %v1160 = vpack.c.b16 %v1144, %v1144
        %v1161 = vpack.c.b16 %v1145, %v1145
        %v1162 = vpack.c.b16 %v1146, %v1146
        %v1163 = vpack.c.b16 %v1147, %v1147
        %v1164 = vpack.c.b16 %v1148, %v1148
        %v1165 = vpack.c.b16 %v1149, %v1149
        %v1166 = vpack.c.b16 %v1150, %v1150
        %1183 = vst [vmem:[%s275] sm:$0xf] %v1151
        %1184 = vst [vmem:[%s275 + $0x4] sm:$0xf] %v1152
        %1185 = vst [vmem:[%s275 + $0x8] sm:$0xf] %v1153
        %1186 = vst [vmem:[%s275 + $0xc] sm:$0xf] %v1154
        %1187 = vst [vmem:[%s275 + $0x10] sm:$0xf] %v1155
        %1188 = vst [vmem:[%s275 + $0x14] sm:$0xf] %v1156
        %1189 = vst [vmem:[%s275 + $0x18] sm:$0xf] %v1157
        %1190 = vst [vmem:[%s275 + $0x1c] sm:$0xf] %v1158
        %1191 = vst [vmem:[%s275 + $0x20] sm:$0xf] %v1159
        %1192 = vst [vmem:[%s275 + $0x24] sm:$0xf] %v1160
        %1193 = vst [vmem:[%s275 + $0x28] sm:$0xf] %v1161
        %1194 = vst [vmem:[%s275 + $0x2c] sm:$0xf] %v1162
        %1195 = vst [vmem:[%s275 + $0x30] sm:$0xf] %v1163
        %1196 = vst [vmem:[%s275 + $0x34] sm:$0xf] %v1164
        %1197 = vst [vmem:[%s275 + $0x38] sm:$0xf] %v1165
        %1198 = vst [vmem:[%s275 + $0x3c] sm:$0xf] %v1166
        %s1199 = sand.u32 %s103, 1
        %s1200 = scalar_lea.sflag [#allocation4], %s1199
        %s1201 = sand.u32 %s103, 1
        %s1202 = smul.addr %s1201, 192
        %s1203 = scalar_lea.vmem [#allocation7], %s1202
        %s1204 = sand.u32 %s27, 1
        %s1205 = scalar_lea.sflag [#allocation9], %s1204
        %s1206 = sand.u32 %s129, 1
        %s1207 = smul.addr %s1206, 128
        %s1208 = scalar_lea.vmem [#allocation8], %s1207
        %s1209 = sand.u32 %s27, 1
        %s1210 = scalar_lea.sflag [#allocation9], %s1209
        %s1211 = sand.u32 %s155, 1
        %s1212 = smul.addr %s1211, 64
        %s1213 = scalar_lea.vmem [#allocation10], %s1212
        // Predicated region
        $region41: #{tpu_custom_call.1} parent=31 // pred_check
          %p1214 = pneg %p113
        $region42: #{tpu_custom_call.1} parent=31 // pred_check_branch
          %1216 = sbr.rel (%p1214) target = $region44
        $region43: #{tpu_custom_call.1} parent=31 // pred_region
          %s1217 = smul.u32 16, %s27
          %s1219 = ssub.s32 3072, 3072
          %1220 = vsyncadd %s1200, %s1219
          %s1221 = smul.addr %s1217, 3
          %s1222 = smul.addr %s1221, 64
          %s1223 = scalar_lea.hbm %s3, %s1222
          %s1224 = sshll.u32 %s1203, 4
          %s1225 = int_to_ptr.vmem [resolvable:$true] %s1224
          %1230 = dma.vmem_to_hbm [thread:$0]  %s1225, 3072, %s1223, %s1200, 192, 192, 12
        $region44: #{tpu_custom_call.1} parent=31 // pred_fallthru
          _
        // Predicated region
        $region45: #{tpu_custom_call.1} parent=31 // pred_check
          %p1231 = pneg %p139
        $region46: #{tpu_custom_call.1} parent=31 // pred_check_branch
          %1233 = sbr.rel (%p1231) target = $region48
        $region47: #{tpu_custom_call.1} parent=31 // pred_region
          %s1234 = smul.u32 16, %s27
          %s1236 = ssub.s32 2048, 2048
          %1237 = vsyncadd %s1205, %s1236
          %s1238 = smul.addr %s1234, 128
          %s1239 = scalar_lea.hbm %s4, %s1238
          %s1240 = sshll.u32 %s1208, 4
          %s1241 = int_to_ptr.vmem [resolvable:$true] %s1240
          %1246 = dma.vmem_to_hbm [thread:$0]  %s1241, 2048, %s1239, %s1205, 128, 128, 8
        $region48: #{tpu_custom_call.1} parent=31 // pred_fallthru
          _
        // Predicated region
        $region49: #{tpu_custom_call.1} parent=31 // pred_check
          %p1247 = pneg %p165
        $region50: #{tpu_custom_call.1} parent=31 // pred_check_branch
          %1249 = sbr.rel (%p1247) target = $region52
        $region51: #{tpu_custom_call.1} parent=31 // pred_region
          %s1250 = smul.u32 16, %s27
          %s1252 = ssub.s32 1024, 1024
          %1253 = vsyncadd %s1210, %s1252
          %s1254 = smul.addr %s1250, 64
          %s1255 = scalar_lea.hbm %s5, %s1254
          %s1256 = sshll.u32 %s1213, 4
          %s1257 = int_to_ptr.vmem [resolvable:$true] %s1256
          %1262 = dma.vmem_to_hbm [thread:$0]  %s1257, 1024, %s1255, %s1210, 64, 64, 4
        $region52: #{tpu_custom_call.1} parent=31 // pred_fallthru
          _
      $region32: #{tpu_custom_call.1} parent=5 // pred_fallthru
        _
      %p1263 = scmp.le.s32.totalorder 2, %s22
      // Predicated region
      $region53: #{tpu_custom_call.1} parent=5 // pred_check
        %p1264 = pneg %p1263
      $region54: #{tpu_custom_call.1} parent=5 // pred_check_branch
        %1266 = sbr.rel (%p1264) target = $region56
      $region55: #{tpu_custom_call.1} parent=5 // pred_region
        %s1267 = ssub.s32 %s22, 2
        // Predicated region
        $region57: #{tpu_custom_call.1} parent=55 // pred_check
          %p1268 = pneg %p119
        $region58: #{tpu_custom_call.1} parent=55 // pred_check_branch
          %1270 = sbr.rel (%p1268) target = $region60
        $region59: #{tpu_custom_call.1} parent=55 // pred_region
          %s1271 = sand.u32 %s104, 1
          %s1272 = scalar_lea.sflag [#allocation4], %s1271
          %s1273 = sand.u32 %s104, 1
          %s1274 = smul.addr %s1273, 192
          %s1275 = scalar_lea.vmem [#allocation7], %s1274
          %1276 = dma.done %s1272, 3072
        $region60: #{tpu_custom_call.1} parent=55 // pred_fallthru
          _
        // Predicated region
        $region61: #{tpu_custom_call.1} parent=55 // pred_check
          %p1277 = pneg %p145
        $region62: #{tpu_custom_call.1} parent=55 // pred_check_branch
          %1279 = sbr.rel (%p1277) target = $region64
        $region63: #{tpu_custom_call.1} parent=55 // pred_region
          %s1280 = sand.u32 %s28, 1
          %s1281 = scalar_lea.sflag [#allocation9], %s1280
          %s1282 = sand.u32 %s130, 1
          %s1283 = smul.addr %s1282, 128
          %s1284 = scalar_lea.vmem [#allocation8], %s1283
          %1285 = dma.done %s1281, 2048
        $region64: #{tpu_custom_call.1} parent=55 // pred_fallthru
          _
        // Predicated region
        $region65: #{tpu_custom_call.1} parent=55 // pred_check
          %p1286 = pneg %p171
        $region66: #{tpu_custom_call.1} parent=55 // pred_check_branch
          %1288 = sbr.rel (%p1286) target = $region68
        $region67: #{tpu_custom_call.1} parent=55 // pred_region
          %s1289 = sand.u32 %s28, 1
          %s1290 = scalar_lea.sflag [#allocation9], %s1289
          %s1291 = sand.u32 %s156, 1
          %s1292 = smul.addr %s1291, 64
          %s1293 = scalar_lea.vmem [#allocation10], %s1292
          %1294 = dma.done %s1290, 1024
        $region68: #{tpu_custom_call.1} parent=55 // pred_fallthru
          _
      $region56: #{tpu_custom_call.1} parent=5 // pred_fallthru
        _
    $region6: #{tpu_custom_call.1} parent=1 // loop_footer
      %s26 = sadd.s32 1, %s22
    $region7: #{tpu_custom_call.1} parent=1 // loop_footer_branch
      %21 = sbr.rel target = $region3
    $region8: #{tpu_custom_call.1} parent=1 // loop_exit
      _
    %1295 = vsyncpa [#allocation3], 1
    %s1296 = scalar_lea.sflag [#allocation3], 1
    %1297 = vsyncpa %s1296, 1
    %1298 = vsyncpa [#allocation6], 1
    %1299 = vsyncpa [#allocation4], 1
    %s1300 = scalar_lea.sflag [#allocation4], 1
    %1301 = vsyncpa %s1300, 1
    %1302 = vsyncpa [#allocation9], 1
    %s1303 = scalar_lea.sflag [#allocation9], 1
    %1304 = vsyncpa %s1303, 1

</llo_original>
